<compile_context>
chip_gen: v6e
topology: v6e:2x2x1
jax: 0.10.0
libtpu: 0.0.40
codegen_flags: <defaults>
</compile_context>

<pallas_src>
import jax
import jax.numpy as jnp
from jax.experimental import pallas as pl
from jax.experimental.pallas import tpu as pltpu


def _round_up(x, m):
    return (x + m - 1) // m * m


def _make_kernel(cache_h: bool, n_tiles: int):
    """Build the two-phase kernel. `cache_h` is a static compile-time flag."""

    def kernel(nvalid_ref, b2_ref,                 # SMEM scalars
               eh_ref, er_ref, et_ref,             # (tb, D) activation tiles
               w1h_ref, w1r_ref, w1t_ref, b1_ref,  # first linear params
               gamma_ref, beta_ref,                # BatchNorm affine
               w2_ref,                             # (1, W) second linear
               o_ref,                              # (1, tb) lane-dense out
               stat0_ref, stat1_ref,               # VMEM (1, W) scratch
               *maybe_hcache):                     # optional (n_tiles, tb, W)
        p = pl.program_id(0)          # phase: 0 = statistics, 1 = normalize
        i = pl.program_id(1)          # batch tile
        tb = eh_ref.shape[0]
        n_valid = nvalid_ref[0]

        def first_linear():
            # (3D -> W) without the lane-axis concat: three accumulating MXU
            # dots on already lane-aligned (tb, D) operands.
            h = jnp.dot(eh_ref[...], w1h_ref[...],
                        preferred_element_type=jnp.float32)
            h = h + jnp.dot(er_ref[...], w1r_ref[...],
                            preferred_element_type=jnp.float32)
            h = h + jnp.dot(et_ref[...], w1t_ref[...],
                            preferred_element_type=jnp.float32)
            return h + b1_ref[...]

        @pl.when(p == 0)
        def _stats_phase():
            @pl.when(i == 0)
            def _init():
                stat0_ref[...] = jnp.zeros_like(stat0_ref)
                stat1_ref[...] = jnp.zeros_like(stat1_ref)

            h = first_linear()
            if cache_h:
                maybe_hcache[0][i] = h            # keep for phase 1

            # Mask batch-padding rows so the BN statistics stay exact.
            row = jax.lax.broadcasted_iota(jnp.int32, (tb, 1), 0) + i * tb
            hm = jnp.where(row < n_valid, h, 0.0)
            stat0_ref[...] += jnp.sum(hm, axis=0, keepdims=True)
            stat1_ref[...] += jnp.sum(hm * hm, axis=0, keepdims=True)

            @pl.when(i == n_tiles - 1)
            def _finalize():
                inv_n = 1.0 / n_valid.astype(jnp.float32)
                mean = stat0_ref[...] * inv_n
                var = stat1_ref[...] * inv_n - mean * mean   # biased variance
                inv_std = jax.lax.rsqrt(var + 1e-5)
                scale = gamma_ref[...] * inv_std             # fold BN affine
                stat0_ref[...] = scale
                stat1_ref[...] = beta_ref[...] - mean * scale

        @pl.when(p == 1)
        def _output_phase():
            if cache_h:
                h = maybe_hcache[0][i]           # reuse cached (tb, W) tile
            else:
                h = first_linear()               # recompute (huge-batch path)
            a = jnp.maximum(h * stat0_ref[...] + stat1_ref[...], 0.0)
            # Second linear (W -> 1) as VPU multiply + lane reduction, not an
            # N=1 MXU matmul.
            y = jnp.sum(a * w2_ref[...], axis=-1)[None, :] + b2_ref[0]
            o_ref[...] = jax.nn.sigmoid(y)       # (1, tb), lane-dense

    return kernel


def baseline_forward(e1_idx, rel_idx, e2_idx, params, *, max_tile_b=512,
                     h_cache_budget_bytes=16 * 2 ** 20):
    """Embedding gathers (JAX glue) + tiled Pallas kernel for the MLP head."""
    ent_emb = params["entity_embeddings"]      # (num_entities, D)
    rel_emb = params["relation_embeddings"]    # (num_relations, D)

    emb_h = ent_emb[e1_idx].astype(jnp.float32)    # (B, D)
    emb_r = rel_emb[rel_idx].astype(jnp.float32)   # (B, D)
    emb_t = ent_emb[e2_idx].astype(jnp.float32)    # (B, D)

    B, D = emb_h.shape
    W = params["b1"].shape[-1]

    # Batch tiling: one padded tile for small B; otherwise 128-multiple tiles
    # so the lane-dense (1, tb) output block stays legal.
    if B <= max_tile_b:
        tb = max(8, _round_up(B, 8))
        b_pad = tb
    else:
        tb = _round_up(max_tile_b, 128)
        b_pad = _round_up(B, tb)
    n_tiles = b_pad // tb

    if b_pad != B:
        pad = ((0, b_pad - B), (0, 0))
        emb_h = jnp.pad(emb_h, pad)
        emb_r = jnp.pad(emb_r, pad)
        emb_t = jnp.pad(emb_t, pad)

    w1 = params["w1"]                          # (3D, W), stored (in, out)
    w1_h, w1_r, w1_t = w1[:D], w1[D:2 * D], w1[2 * D:]
    b1 = params["b1"].reshape(1, W).astype(jnp.float32)
    gamma = params["bn_gamma"].reshape(1, W).astype(jnp.float32)
    beta = params["bn_beta"].reshape(1, W).astype(jnp.float32)
    w2_row = params["w2"].reshape(1, W).astype(jnp.float32)   # (W,1) -> (1,W)
    b2 = params["b2"].reshape(1).astype(jnp.float32)          # scalar, SMEM
    n_valid = jnp.array([B], jnp.int32)                       # scalar, SMEM

    # Cache the hidden activation across phases when it fits a VMEM budget.
    cache_h = (b_pad * W * 4) <= h_cache_budget_bytes

    if cache_h:
        # Phase 1 reads the cached activations only; pin the activation block
        # index during phase 1 so no tiles are re-fetched from HBM.
        act_idx = lambda p, i: (i * (1 - p) + (n_tiles - 1) * p, 0)
    else:
        act_idx = lambda p, i: (i, 0)

    act_spec = pl.BlockSpec((tb, D), act_idx)
    w1_spec = pl.BlockSpec((D, W), lambda p, i: (0, 0))
    row_spec = pl.BlockSpec((1, W), lambda p, i: (0, 0))
    smem_spec = pl.BlockSpec(memory_space=pltpu.MemorySpace.SMEM)

    scratch_shapes = [pltpu.VMEM((1, W), jnp.float32),
                      pltpu.VMEM((1, W), jnp.float32)]
    if cache_h:
        scratch_shapes.append(pltpu.VMEM((n_tiles, tb, W), jnp.float32))

    # Rough working-set accounting -> explicit VMEM limit (v7x-safe, 64 MiB).
    est_bytes = 4 * (2 * 3 * tb * D + 2 * tb        # dbl-buffered acts + out
                     + 2 * (3 * D * W + 4 * W)      # weight / row params
                     + 2 * W)                       # stats scratch
    if cache_h:
        est_bytes += 4 * n_tiles * tb * W
    vmem_limit = int(min(48 * 2 ** 20, max(16 * 2 ** 20, 2 * est_bytes)))

    out_row = pl.pallas_call(
        _make_kernel(cache_h, n_tiles),
        out_shape=jax.ShapeDtypeStruct((1, b_pad), jnp.float32),
        grid=(2, n_tiles),
        in_specs=[smem_spec, smem_spec,
                  act_spec, act_spec, act_spec,
                  w1_spec, w1_spec, w1_spec, row_spec,
                  row_spec, row_spec, row_spec],
        # Phase 0 never writes the output; pin its block index to 0 so the
        # only HBM writebacks are the n_tiles valid phase-1 tiles.
        out_specs=pl.BlockSpec((1, tb), lambda p, i: (0, i * p)),
        scratch_shapes=scratch_shapes,
        compiler_params=pltpu.CompilerParams(
            dimension_semantics=("arbitrary", "arbitrary"),
            vmem_limit_bytes=vmem_limit),
    )(n_valid, b2, emb_h, emb_r, emb_t,
      w1_h, w1_r, w1_t, b1, gamma, beta, w2_row)

    return out_row[0, :B].reshape(B, 1)


def _reference_forward(e1_idx, rel_idx, e2_idx, params):
    """Pure-JAX reference matching the PyTorch forward (training-mode BN)."""
    emb_h = params["entity_embeddings"][e1_idx]
    emb_r = params["relation_embeddings"][rel_idx]
    emb_t = params["entity_embeddings"][e2_idx]
    x = jnp.concatenate([emb_h, emb_r, emb_t], axis=1)
    h = x @ params["w1"] + params["b1"]
    mean = jnp.mean(h, axis=0, keepdims=True)
    var = jnp.mean((h - mean) ** 2, axis=0, keepdims=True)
    hn = (h - mean) * jax.lax.rsqrt(var + 1e-5)
    hn = hn * params["bn_gamma"] + params["bn_beta"]
    a = jnp.maximum(hn, 0.0)
    return jax.nn.sigmoid(a @ params["w2"] + params["b2"])


def init_params(key, embedding_dim, num_entities, num_relations):
    width = 2 * embedding_dim
    in_dim = 3 * embedding_dim
    k = jax.random.split(key, 6)
    params = {
        # nn.Embedding default init ~ N(0, 1)
        "entity_embeddings": jax.random.normal(
            k[0], (num_entities, embedding_dim), jnp.float32),
        "relation_embeddings": jax.random.normal(
            k[1], (num_relations, embedding_dim), jnp.float32),
        # Linear weights stored transposed (in, out) so the kernel does x @ w
        "w1": jax.random.uniform(k[2], (in_dim, width), jnp.float32,
                                 minval=-1.0 / jnp.sqrt(in_dim),
                                 maxval=1.0 / jnp.sqrt(in_dim)),
        "b1": jax.random.uniform(k[3], (1, width), jnp.float32,
                                 minval=-1.0 / jnp.sqrt(in_dim),
                                 maxval=1.0 / jnp.sqrt(in_dim)),
        # BatchNorm1d affine params (PyTorch init: weight=1, bias=0)
        "bn_gamma": jnp.ones((1, width), jnp.float32),
        "bn_beta": jnp.zeros((1, width), jnp.float32),
        "w2": jax.random.uniform(k[4], (width, 1), jnp.float32,
                                 minval=-1.0 / jnp.sqrt(width),
                                 maxval=1.0 / jnp.sqrt(width)),
        "b2": jax.random.uniform(k[5], (1, 1), jnp.float32,
                                 minval=-1.0 / jnp.sqrt(width),
                                 maxval=1.0 / jnp.sqrt(width)),
    }
    return params


if __name__ == "__main__":
    embedding_dim = 32
    num_entities = 20
    num_relations = 5

    key = jax.random.PRNGKey(0)
    pkey, i1, i2, i3 = jax.random.split(key, 4)
    params = init_params(pkey, embedding_dim, num_entities, num_relations)

    # --- small single-tile case (matches the module's typical tiny batch) ---
    batch = 8
    e1_idx = jax.random.randint(i1, (batch,), 0, num_entities, dtype=jnp.int32)
    rel_idx = jax.random.randint(i2, (batch,), 0, num_relations, dtype=jnp.int32)
    e2_idx = jax.random.randint(i3, (batch,), 0, num_entities, dtype=jnp.int32)

    out = baseline_forward(e1_idx, rel_idx, e2_idx, params)
    jax.block_until_ready(out)
    assert out.shape == (batch, 1)
    ref = _reference_forward(e1_idx, rel_idx, e2_idx, params)
    assert jnp.allclose(out, ref, atol=1e-5, rtol=1e-5), "single-tile mismatch"

    # --- multi-tile + padded case (two-pass global BN, cached activations) ---
    batch2 = 200
    k1, k2, k3 = jax.random.split(jax.random.PRNGKey(1), 3)
    e1b = jax.random.randint(k1, (batch2,), 0, num_entities, dtype=jnp.int32)
    relb = jax.random.randint(k2, (batch2,), 0, num_relations, dtype=jnp.int32)
    e2b = jax.random.randint(k3, (batch2,), 0, num_entities, dtype=jnp.int32)

    out2 = baseline_forward(e1b, relb, e2b, params, max_tile_b=128)
    jax.block_until_ready(out2)
    assert out2.shape == (batch2, 1)
    ref2 = _reference_forward(e1b, relb, e2b, params)
    assert jnp.allclose(out2, ref2, atol=1e-5, rtol=1e-5), "multi-tile mismatch"

    # --- same case with the cache disabled (exercises the recompute path) ---
    out3 = baseline_forward(e1b, relb, e2b, params, max_tile_b=128,
                            h_cache_budget_bytes=0)
    jax.block_until_ready(out3)
    assert jnp.allclose(out3, ref2, atol=1e-5, rtol=1e-5), "recompute mismatch"

    print("KERNEL_OK")
</pallas_src>

<mosaic_0001>
module attributes {stable_mosaic.version = 11 : i64} {
  func.func @kernel(%arg0: i32, %arg1: i32, %arg2: memref<1xi32, #tpu.memory_space<smem>>, %arg3: memref<1xf32, #tpu.memory_space<smem>>, %arg4: memref<8x32xf32, #tpu.memory_space<vmem>>, %arg5: memref<8x32xf32, #tpu.memory_space<vmem>>, %arg6: memref<8x32xf32, #tpu.memory_space<vmem>>, %arg7: memref<32x64xf32, #tpu.memory_space<vmem>>, %arg8: memref<32x64xf32, #tpu.memory_space<vmem>>, %arg9: memref<32x64xf32, #tpu.memory_space<vmem>>, %arg10: memref<1x64xf32, #tpu.memory_space<vmem>>, %arg11: memref<1x64xf32, #tpu.memory_space<vmem>>, %arg12: memref<1x64xf32, #tpu.memory_space<vmem>>, %arg13: memref<1x64xf32, #tpu.memory_space<vmem>>, %arg14: memref<1x8xf32, #tpu.memory_space<vmem>>, %arg15: memref<1x64xf32, #tpu.memory_space<vmem>>, %arg16: memref<1x64xf32, #tpu.memory_space<vmem>>, %arg17: memref<1x8x64xf32, #tpu.memory_space<vmem>>) attributes {dimension_semantics = [#tpu.dimension_semantics<arbitrary>, #tpu.dimension_semantics<arbitrary>], iteration_bounds = array<i64: 2, 1>, scalar_prefetch = 0 : i64, scratch_operands = 3 : i64, tpu.core_type = #tpu.core_type<tc>, window_params = [{transform_indices = @transform_0, window_bounds = array<i64: 1>}, {transform_indices = @transform_1, window_bounds = array<i64: 1>}, {transform_indices = @transform_2, window_bounds = array<i64: 8, 32>}, {transform_indices = @transform_3, window_bounds = array<i64: 8, 32>}, {transform_indices = @transform_4, window_bounds = array<i64: 8, 32>}, {pipeline_mode = #tpu.pipeline_mode<synchronous>, transform_indices = @transform_5, window_bounds = array<i64: 32, 64>}, {pipeline_mode = #tpu.pipeline_mode<synchronous>, transform_indices = @transform_6, window_bounds = array<i64: 32, 64>}, {pipeline_mode = #tpu.pipeline_mode<synchronous>, transform_indices = @transform_7, window_bounds = array<i64: 32, 64>}, {pipeline_mode = #tpu.pipeline_mode<synchronous>, transform_indices = @transform_8, window_bounds = array<i64: 1, 64>}, {pipeline_mode = #tpu.pipeline_mode<synchronous>, transform_indices = @transform_9, window_bounds = array<i64: 1, 64>}, {pipeline_mode = #tpu.pipeline_mode<synchronous>, transform_indices = @transform_10, window_bounds = array<i64: 1, 64>}, {pipeline_mode = #tpu.pipeline_mode<synchronous>, transform_indices = @transform_11, window_bounds = array<i64: 1, 64>}, {transform_indices = @transform_12, window_bounds = array<i64: 1, 8>}]} {
    %c0 = arith.constant 0 : index
    %0 = memref.load %arg2[%c0] : memref<1xi32, #tpu.memory_space<smem>>
    %c0_i32 = arith.constant 0 : i32
    %1 = arith.cmpi eq, %arg0, %c0_i32 : i32
    %2 = arith.extui %1 : i1 to i32
    %c0_i32_0 = arith.constant 0 : i32
    %3 = arith.cmpi ne, %2, %c0_i32_0 : i32
    scf.if %3 {
      %c0_i32_2 = arith.constant 0 : i32
      %7 = arith.cmpi eq, %arg1, %c0_i32_2 : i32
      %8 = arith.extui %7 : i1 to i32
      %c0_i32_3 = arith.constant 0 : i32
      %9 = arith.cmpi ne, %8, %c0_i32_3 : i32
      scf.if %9 {
        %cst_35 = arith.constant 0.000000e+00 : f32
        %52 = vector.broadcast %cst_35 : f32 to vector<1x64xf32>
        %c0_36 = arith.constant 0 : index
        %c0_37 = arith.constant 0 : index
        %53 = vector.load %arg15[%c0_36, %c0_37] : memref<1x64xf32, #tpu.memory_space<vmem>>, vector<1x64xf32>
        tpu.vector_store %arg15[%c0_36, %c0_37], %52 {strides = array<i32>} : memref<1x64xf32, #tpu.memory_space<vmem>>, vector<1x64xf32>,
        %cst_38 = arith.constant 0.000000e+00 : f32
        %54 = vector.broadcast %cst_38 : f32 to vector<1x64xf32>
        %c0_39 = arith.constant 0 : index
        %c0_40 = arith.constant 0 : index
        %55 = vector.load %arg16[%c0_39, %c0_40] : memref<1x64xf32, #tpu.memory_space<vmem>>, vector<1x64xf32>
        tpu.vector_store %arg16[%c0_39, %c0_40], %54 {strides = array<i32>} : memref<1x64xf32, #tpu.memory_space<vmem>>, vector<1x64xf32>,
      } else {
      }
      %c0_4 = arith.constant 0 : index
      %c0_5 = arith.constant 0 : index
      %10 = vector.load %arg4[%c0_4, %c0_5] : memref<8x32xf32, #tpu.memory_space<vmem>>, vector<8x32xf32>
      %c0_6 = arith.constant 0 : index
      %c0_7 = arith.constant 0 : index
      %11 = vector.load %arg7[%c0_6, %c0_7] : memref<32x64xf32, #tpu.memory_space<vmem>>, vector<32x64xf32>
      %cst = arith.constant dense<0.000000e+00> : vector<8x64xf32>
      %12 = tpu.matmul %10, %11, %cst {dimension_numbers = #tpu.dot_dimension_numbers<[1], [0], [0], [1], [0, 0, 1, 1], [], []>} : vector<8x32xf32>, vector<32x64xf32>, vector<8x64xf32> -> vector<8x64xf32>
      %c0_8 = arith.constant 0 : index
      %c0_9 = arith.constant 0 : index
      %13 = vector.load %arg5[%c0_8, %c0_9] : memref<8x32xf32, #tpu.memory_space<vmem>>, vector<8x32xf32>
      %c0_10 = arith.constant 0 : index
      %c0_11 = arith.constant 0 : index
      %14 = vector.load %arg8[%c0_10, %c0_11] : memref<32x64xf32, #tpu.memory_space<vmem>>, vector<32x64xf32>
      %cst_12 = arith.constant dense<0.000000e+00> : vector<8x64xf32>
      %15 = tpu.matmul %13, %14, %cst_12 {dimension_numbers = #tpu.dot_dimension_numbers<[1], [0], [0], [1], [0, 0, 1, 1], [], []>} : vector<8x32xf32>, vector<32x64xf32>, vector<8x64xf32> -> vector<8x64xf32>
      %16 = arith.addf %12, %15 : vector<8x64xf32>
      %c0_13 = arith.constant 0 : index
      %c0_14 = arith.constant 0 : index
      %17 = vector.load %arg6[%c0_13, %c0_14] : memref<8x32xf32, #tpu.memory_space<vmem>>, vector<8x32xf32>
      %c0_15 = arith.constant 0 : index
      %c0_16 = arith.constant 0 : index
      %18 = vector.load %arg9[%c0_15, %c0_16] : memref<32x64xf32, #tpu.memory_space<vmem>>, vector<32x64xf32>
      %cst_17 = arith.constant dense<0.000000e+00> : vector<8x64xf32>
      %19 = tpu.matmul %17, %18, %cst_17 {dimension_numbers = #tpu.dot_dimension_numbers<[1], [0], [0], [1], [0, 0, 1, 1], [], []>} : vector<8x32xf32>, vector<32x64xf32>, vector<8x64xf32> -> vector<8x64xf32>
      %20 = arith.addf %16, %19 : vector<8x64xf32>
      %c0_18 = arith.constant 0 : index
      %c0_19 = arith.constant 0 : index
      %21 = vector.load %arg10[%c0_18, %c0_19] : memref<1x64xf32, #tpu.memory_space<vmem>>, vector<1x64xf32>
      %22 = vector.broadcast %21 : vector<1x64xf32> to vector<8x64xf32>
      %23 = arith.addf %20, %22 : vector<8x64xf32>
      %24 = arith.index_cast %arg1 : i32 to index
      %c0_20 = arith.constant 0 : index
      %c0_21 = arith.constant 0 : index
      %25 = vector.load %arg17[%24, %c0_20, %c0_21] : memref<1x8x64xf32, #tpu.memory_space<vmem>>, vector<1x8x64xf32>
      %26 = vector.shape_cast %25 : vector<1x8x64xf32> to vector<8x64xf32>
      %27 = vector.shape_cast %23 : vector<8x64xf32> to vector<1x8x64xf32>
      tpu.vector_store %arg17[%24, %c0_20, %c0_21], %27 {strides = array<i32>} : memref<1x8x64xf32, #tpu.memory_space<vmem>>, vector<1x8x64xf32>,
      %28 = tpu.iota {dimensions = array<i32: 0>} : vector<8x1xi32>
      %c8_i32 = arith.constant 8 : i32
      %29 = arith.muli %arg1, %c8_i32 : i32
      %30 = vector.broadcast %29 : i32 to vector<8x1xi32>
      %31 = arith.addi %28, %30 : vector<8x1xi32>
      %32 = vector.broadcast %0 : i32 to vector<8x1xi32>
      %33 = arith.cmpi slt, %31, %32 : vector<8x1xi32>
      %cst_22 = arith.constant 0.000000e+00 : f32
      %34 = vector.shape_cast %33 : vector<8x1xi1> to vector<8x1xi1>
      %35 = vector.broadcast %34 : vector<8x1xi1> to vector<8x64xi1>
      %36 = vector.broadcast %cst_22 : f32 to vector<8x64xf32>
      %37 = arith.select %35, %23, %36 : vector<8x64xi1>, vector<8x64xf32>
      %c0_23 = arith.constant 0 : index
      %c0_24 = arith.constant 0 : index
      %38 = vector.load %arg15[%c0_23, %c0_24] : memref<1x64xf32, #tpu.memory_space<vmem>>, vector<1x64xf32>
      %cst_25 = arith.constant dense<0.000000e+00> : vector<64xf32>
      %39 = vector.multi_reduction <add>, %37, %cst_25 [0] : vector<8x64xf32> to vector<64xf32>
      %40 = vector.shape_cast %39 : vector<64xf32> to vector<1x64xf32>
      %41 = arith.addf %38, %40 : vector<1x64xf32>
      %c0_26 = arith.constant 0 : index
      %c0_27 = arith.constant 0 : index
      %42 = vector.load %arg15[%c0_26, %c0_27] : memref<1x64xf32, #tpu.memory_space<vmem>>, vector<1x64xf32>
      tpu.vector_store %arg15[%c0_26, %c0_27], %41 {strides = array<i32>} : memref<1x64xf32, #tpu.memory_space<vmem>>, vector<1x64xf32>,
      %c0_28 = arith.constant 0 : index
      %c0_29 = arith.constant 0 : index
      %43 = vector.load %arg16[%c0_28, %c0_29] : memref<1x64xf32, #tpu.memory_space<vmem>>, vector<1x64xf32>
      %44 = arith.mulf %37, %37 : vector<8x64xf32>
      %cst_30 = arith.constant dense<0.000000e+00> : vector<64xf32>
      %45 = vector.multi_reduction <add>, %44, %cst_30 [0] : vector<8x64xf32> to vector<64xf32>
      %46 = vector.shape_cast %45 : vector<64xf32> to vector<1x64xf32>
      %47 = arith.addf %43, %46 : vector<1x64xf32>
      %c0_31 = arith.constant 0 : index
      %c0_32 = arith.constant 0 : index
      %48 = vector.load %arg16[%c0_31, %c0_32] : memref<1x64xf32, #tpu.memory_space<vmem>>, vector<1x64xf32>
      tpu.vector_store %arg16[%c0_31, %c0_32], %47 {strides = array<i32>} : memref<1x64xf32, #tpu.memory_space<vmem>>, vector<1x64xf32>,
      %c0_i32_33 = arith.constant 0 : i32
      %49 = arith.cmpi eq, %arg1, %c0_i32_33 : i32
      %50 = arith.extui %49 : i1 to i32
      %c0_i32_34 = arith.constant 0 : i32
      %51 = arith.cmpi ne, %50, %c0_i32_34 : i32
      scf.if %51 {
        %52 = arith.sitofp %0 : i32 to f32
        %cst_35 = arith.constant 1.000000e+00 : f32
        %53 = arith.divf %cst_35, %52 : f32
        %c0_36 = arith.constant 0 : index
        %c0_37 = arith.constant 0 : index
        %54 = vector.load %arg15[%c0_36, %c0_37] : memref<1x64xf32, #tpu.memory_space<vmem>>, vector<1x64xf32>
        %55 = vector.broadcast %53 : f32 to vector<1x64xf32>
        %56 = arith.mulf %54, %55 : vector<1x64xf32>
        %c0_38 = arith.constant 0 : index
        %c0_39 = arith.constant 0 : index
        %57 = vector.load %arg16[%c0_38, %c0_39] : memref<1x64xf32, #tpu.memory_space<vmem>>, vector<1x64xf32>
        %58 = vector.broadcast %53 : f32 to vector<1x64xf32>
        %59 = arith.mulf %57, %58 : vector<1x64xf32>
        %60 = arith.mulf %56, %56 : vector<1x64xf32>
        %61 = arith.subf %59, %60 : vector<1x64xf32>
        %cst_40 = arith.constant 9.99999974E-6 : f32
        %62 = vector.broadcast %cst_40 : f32 to vector<1x64xf32>
        %63 = arith.addf %61, %62 : vector<1x64xf32>
        %64 = math.rsqrt %63 : vector<1x64xf32>
        %c0_41 = arith.constant 0 : index
        %c0_42 = arith.constant 0 : index
        %65 = vector.load %arg11[%c0_41, %c0_42] : memref<1x64xf32, #tpu.memory_space<vmem>>, vector<1x64xf32>
        %66 = arith.mulf %65, %64 : vector<1x64xf32>
        %c0_43 = arith.constant 0 : index
        %c0_44 = arith.constant 0 : index
        %67 = vector.load %arg15[%c0_43, %c0_44] : memref<1x64xf32, #tpu.memory_space<vmem>>, vector<1x64xf32>
        tpu.vector_store %arg15[%c0_43, %c0_44], %66 {strides = array<i32>} : memref<1x64xf32, #tpu.memory_space<vmem>>, vector<1x64xf32>,
        %c0_45 = arith.constant 0 : index
        %c0_46 = arith.constant 0 : index
        %68 = vector.load %arg12[%c0_45, %c0_46] : memref<1x64xf32, #tpu.memory_space<vmem>>, vector<1x64xf32>
        %69 = arith.mulf %56, %66 : vector<1x64xf32>
        %70 = arith.subf %68, %69 : vector<1x64xf32>
        %c0_47 = arith.constant 0 : index
        %c0_48 = arith.constant 0 : index
        %71 = vector.load %arg16[%c0_47, %c0_48] : memref<1x64xf32, #tpu.memory_space<vmem>>, vector<1x64xf32>
        tpu.vector_store %arg16[%c0_47, %c0_48], %70 {strides = array<i32>} : memref<1x64xf32, #tpu.memory_space<vmem>>, vector<1x64xf32>,
      } else {
      }
    } else {
    }
    %c1_i32 = arith.constant 1 : i32
    %4 = arith.cmpi eq, %arg0, %c1_i32 : i32
    %5 = arith.extui %4 : i1 to i32
    %c0_i32_1 = arith.constant 0 : i32
    %6 = arith.cmpi ne, %5, %c0_i32_1 : i32
    scf.if %6 {
      %7 = arith.index_cast %arg1 : i32 to index
      %c0_2 = arith.constant 0 : index
      %c0_3 = arith.constant 0 : index
      %8 = vector.load %arg17[%7, %c0_2, %c0_3] : memref<1x8x64xf32, #tpu.memory_space<vmem>>, vector<1x8x64xf32>
      %9 = vector.shape_cast %8 : vector<1x8x64xf32> to vector<8x64xf32>
      %c0_4 = arith.constant 0 : index
      %c0_5 = arith.constant 0 : index
      %10 = vector.load %arg15[%c0_4, %c0_5] : memref<1x64xf32, #tpu.memory_space<vmem>>, vector<1x64xf32>
      %11 = vector.broadcast %10 : vector<1x64xf32> to vector<8x64xf32>
      %12 = arith.mulf %9, %11 : vector<8x64xf32>
      %c0_6 = arith.constant 0 : index
      %c0_7 = arith.constant 0 : index
      %13 = vector.load %arg16[%c0_6, %c0_7] : memref<1x64xf32, #tpu.memory_space<vmem>>, vector<1x64xf32>
      %14 = vector.broadcast %13 : vector<1x64xf32> to vector<8x64xf32>
      %15 = arith.addf %12, %14 : vector<8x64xf32>
      %cst = arith.constant 0.000000e+00 : f32
      %16 = vector.broadcast %cst : f32 to vector<8x64xf32>
      %17 = arith.maximumf %15, %16 : vector<8x64xf32>
      %c0_8 = arith.constant 0 : index
      %c0_9 = arith.constant 0 : index
      %18 = vector.load %arg13[%c0_8, %c0_9] : memref<1x64xf32, #tpu.memory_space<vmem>>, vector<1x64xf32>
      %19 = vector.broadcast %18 : vector<1x64xf32> to vector<8x64xf32>
      %20 = arith.mulf %17, %19 : vector<8x64xf32>
      %cst_10 = arith.constant dense<0.000000e+00> : vector<8xf32>
      %21 = vector.multi_reduction <add>, %20, %cst_10 [1] : vector<8x64xf32> to vector<8xf32>
      %22 = vector.shape_cast %21 : vector<8xf32> to vector<1x8xf32>
      %c0_11 = arith.constant 0 : index
      %23 = memref.load %arg3[%c0_11] : memref<1xf32, #tpu.memory_space<smem>>
      %24 = vector.broadcast %23 : f32 to vector<1x8xf32>
      %25 = arith.addf %22, %24 : vector<1x8xf32>
      %26 = arith.negf %25 : vector<1x8xf32>
      %27 = math.exp %26 : vector<1x8xf32>
      %cst_12 = arith.constant 1.000000e+00 : f32
      %28 = vector.broadcast %cst_12 : f32 to vector<1x8xf32>
      %29 = arith.addf %28, %27 : vector<1x8xf32>
      %30 = arith.divf %28, %29 : vector<1x8xf32>
      %c0_13 = arith.constant 0 : index
      %c0_14 = arith.constant 0 : index
      %31 = vector.load %arg14[%c0_13, %c0_14] : memref<1x8xf32, #tpu.memory_space<vmem>>, vector<1x8xf32>
      tpu.vector_store %arg14[%c0_13, %c0_14], %30 {strides = array<i32>} : memref<1x8xf32, #tpu.memory_space<vmem>>, vector<1x8xf32>,
    } else {
    }
    return
  }
  func.func @transform_0(%arg0: i32, %arg1: i32) -> i32 {
    %c0_i32 = arith.constant 0 : i32
    %c0_i32_0 = arith.constant 0 : i32
    return %c0_i32 : i32
  }
  func.func @transform_1(%arg0: i32, %arg1: i32) -> i32 {
    %c0_i32 = arith.constant 0 : i32
    %c0_i32_0 = arith.constant 0 : i32
    return %c0_i32 : i32
  }
  func.func @transform_2(%arg0: i32, %arg1: i32) -> (i32, i32) {
    %c1_i32 = arith.constant 1 : i32
    %0 = arith.subi %c1_i32, %arg0 : i32
    %1 = arith.muli %arg1, %0 : i32
    %c0_i32 = arith.constant 0 : i32
    %2 = arith.muli %c0_i32, %arg0 : i32
    %3 = arith.addi %1, %2 : i32
    %c0_i32_0 = arith.constant 0 : i32
    %c0_i32_1 = arith.constant 0 : i32
    return %3, %c0_i32_0 : i32, i32
  }
  func.func @transform_3(%arg0: i32, %arg1: i32) -> (i32, i32) {
    %c1_i32 = arith.constant 1 : i32
    %0 = arith.subi %c1_i32, %arg0 : i32
    %1 = arith.muli %arg1, %0 : i32
    %c0_i32 = arith.constant 0 : i32
    %2 = arith.muli %c0_i32, %arg0 : i32
    %3 = arith.addi %1, %2 : i32
    %c0_i32_0 = arith.constant 0 : i32
    %c0_i32_1 = arith.constant 0 : i32
    return %3, %c0_i32_0 : i32, i32
  }
  func.func @transform_4(%arg0: i32, %arg1: i32) -> (i32, i32) {
    %c1_i32 = arith.constant 1 : i32
    %0 = arith.subi %c1_i32, %arg0 : i32
    %1 = arith.muli %arg1, %0 : i32
    %c0_i32 = arith.constant 0 : i32
    %2 = arith.muli %c0_i32, %arg0 : i32
    %3 = arith.addi %1, %2 : i32
    %c0_i32_0 = arith.constant 0 : i32
    %c0_i32_1 = arith.constant 0 : i32
    return %3, %c0_i32_0 : i32, i32
  }
  func.func @transform_5(%arg0: i32, %arg1: i32) -> (i32, i32) {
    %c0_i32 = arith.constant 0 : i32
    %c0_i32_0 = arith.constant 0 : i32
    %c0_i32_1 = arith.constant 0 : i32
    return %c0_i32, %c0_i32_0 : i32, i32
  }
  func.func @transform_6(%arg0: i32, %arg1: i32) -> (i32, i32) {
    %c0_i32 = arith.constant 0 : i32
    %c0_i32_0 = arith.constant 0 : i32
    %c0_i32_1 = arith.constant 0 : i32
    return %c0_i32, %c0_i32_0 : i32, i32
  }
  func.func @transform_7(%arg0: i32, %arg1: i32) -> (i32, i32) {
    %c0_i32 = arith.constant 0 : i32
    %c0_i32_0 = arith.constant 0 : i32
    %c0_i32_1 = arith.constant 0 : i32
    return %c0_i32, %c0_i32_0 : i32, i32
  }
  func.func @transform_8(%arg0: i32, %arg1: i32) -> (i32, i32) {
    %c0_i32 = arith.constant 0 : i32
    %c0_i32_0 = arith.constant 0 : i32
    %c0_i32_1 = arith.constant 0 : i32
    return %c0_i32, %c0_i32_0 : i32, i32
  }
  func.func @transform_9(%arg0: i32, %arg1: i32) -> (i32, i32) {
    %c0_i32 = arith.constant 0 : i32
    %c0_i32_0 = arith.constant 0 : i32
    %c0_i32_1 = arith.constant 0 : i32
    return %c0_i32, %c0_i32_0 : i32, i32
  }
  func.func @transform_10(%arg0: i32, %arg1: i32) -> (i32, i32) {
    %c0_i32 = arith.constant 0 : i32
    %c0_i32_0 = arith.constant 0 : i32
    %c0_i32_1 = arith.constant 0 : i32
    return %c0_i32, %c0_i32_0 : i32, i32
  }
  func.func @transform_11(%arg0: i32, %arg1: i32) -> (i32, i32) {
    %c0_i32 = arith.constant 0 : i32
    %c0_i32_0 = arith.constant 0 : i32
    %c0_i32_1 = arith.constant 0 : i32
    return %c0_i32, %c0_i32_0 : i32, i32
  }
  func.func @transform_12(%arg0: i32, %arg1: i32) -> (i32, i32) {
    %0 = arith.muli %arg1, %arg0 : i32
    %c0_i32 = arith.constant 0 : i32
    %c0_i32_0 = arith.constant 0 : i32
    return %c0_i32, %0 : i32, i32
  }
}

</mosaic_0001>

<llo_original>
// kernel: tpu_custom_call.1
$region0: #{tpu_custom_call.1}
  #allocation0 [shape = 'u32[]', space=smem, size = 0x4, offset = 0x4, fixed_abs, tag = 'smem constant byte address 0x4 - core index']
  #allocation1 [shape = 'u32[144,128]{1,0:T(1,128)}', space=vmem, size = 0x12000, scoped, tag = 'internal scratch']
  #allocation2 [shape = 'f32[1,64]{1,0:T(1,128)}', space=vmem, size = 0x200, scoped, tag = 'scratch operand']
  #allocation3 [shape = 'f32[1,64]{1,0:T(1,128)}', space=vmem, size = 0x200, scoped, tag = 'scratch operand']
  #allocation4 [shape = 'f32[1,8,64]{2,1,0:T(8,128)}', space=vmem, size = 0x1000, scoped, tag = 'scratch operand']
  #allocation5 [shape = 's32[1]{0:T(128)S(6)}', space=smem, size = 0x200, scoped, tag = 'scoped memory for tpu_custom_call.1']
  #allocation6 [shape = 'f32[1]{0:T(128)S(6)}', space=smem, size = 0x200, scoped, tag = 'scoped memory for tpu_custom_call.1']
  %s0 = inlined_call_operand.<no memory space> [shape: s32[1], index: 0, kind: input, shape index: {}]
  %s1 = inlined_call_operand.<no memory space> [shape: f32[1], index: 1, kind: input, shape index: {}]
  %s2 = inlined_call_operand.hbm [shape: f32[8,32], index: 2, kind: input, shape index: {}]
  %s3 = inlined_call_operand.hbm [shape: f32[8,32], index: 3, kind: input, shape index: {}]
  %s4 = inlined_call_operand.hbm [shape: f32[8,32], index: 4, kind: input, shape index: {}]
  %s5 = inlined_call_operand.hbm [shape: f32[32,64], index: 5, kind: input, shape index: {}]
  %s6 = inlined_call_operand.hbm [shape: f32[32,64], index: 6, kind: input, shape index: {}]
  %s7 = inlined_call_operand.hbm [shape: f32[32,64], index: 7, kind: input, shape index: {}]
  %s8 = inlined_call_operand.vmem [shape: f32[1,64], index: 8, kind: input, shape index: {}]
  %s9 = inlined_call_operand.vmem [shape: f32[1,64], index: 9, kind: input, shape index: {}]
  %s10 = inlined_call_operand.vmem [shape: f32[1,64], index: 10, kind: input, shape index: {}]
  %s11 = inlined_call_operand.vmem [shape: f32[1,64], index: 11, kind: input, shape index: {}]
  %s12 = inlined_call_operand.hbm [shape: f32[1,8], index: 12, kind: output, shape index: {}]
  %s13 = sld [smem:[#allocation0]]
  $region121: #{tpu_custom_call.1} parent=0
    _
  %s15 = ssub.s32 1, %s13
  %s16 = scalar_select 0, %s15, %s13
  %17 = sst [smem:[#allocation5]] %s0
  %18 = sst [smem:[#allocation6]] %s1
  $region1: #{tpu_custom_call.1} parent=0
    #allocation7 [shape = 'u8[8192]{0}', space=vmem, size = 0x2000, scoped, tag = 'input window, operand 2']
    #allocation8 [shape = 's32[2]{0}', space=sflag, size = 0x8, scoped, tag = 'scoped memory for tpu_custom_call.1']
    #allocation9 [shape = 's32[2]{0}', space=sflag, size = 0x8, scoped, tag = 'scoped memory for tpu_custom_call.1']
    #allocation10 [shape = 'u8[8192]{0}', space=vmem, size = 0x2000, scoped, tag = 'input window, operand 3']
    #allocation11 [shape = 's32[2]{0}', space=sflag, size = 0x8, scoped, tag = 'scoped memory for tpu_custom_call.1']
    #allocation12 [shape = 'u8[8192]{0}', space=vmem, size = 0x2000, scoped, tag = 'input window, operand 4']
    #allocation13 [shape = 'u8[16384]{0}', space=vmem, size = 0x4000, scoped, tag = 'input window, operand 5, single buffered']
    #allocation14 [shape = 's32[1]{0}', space=sflag, size = 0x4, scoped, tag = 'scoped memory for tpu_custom_call.1']
    #allocation15 [shape = 'u8[16384]{0}', space=vmem, size = 0x4000, scoped, tag = 'input window, operand 6, single buffered']
    #allocation16 [shape = 'u8[16384]{0}', space=vmem, size = 0x4000, scoped, tag = 'input window, operand 7, single buffered']
    #allocation17 [shape = 's32[1]{0}', space=sflag, size = 0x4, scoped, tag = 'scoped memory for tpu_custom_call.1']
    #allocation18 [shape = 'u8[1024]{0}', space=vmem, size = 0x400, scoped, tag = 'output window, operand 0']
    %19 = vsyncpa [#allocation8], 0
    %s20 = scalar_lea.sflag [#allocation8], 1
    %21 = vsyncpa %s20, 0
    %22 = vsyncpa [#allocation11], 0
    %s23 = scalar_lea.sflag [#allocation11], 1
    %24 = vsyncpa %s23, 0
    %25 = vsyncpa [#allocation14], 0
    %26 = vsyncpa [#allocation17], 0
    %27 = vsyncpa [#allocation9], 0
    %s28 = scalar_lea.sflag [#allocation9], 1
    %29 = vsyncpa %s28, 0
    loop: start=0, step=1, limit=4
    $region2: #{tpu_custom_call.1} parent=1 // loop_pre_header
      _
    $region3: #{tpu_custom_call.1} parent=1 // loop_header
      %s31 = sphi 0, %s35
      %p32 = scmp.ge.s32.totalorder %s31, 4
      %s38 = sphi 0, %s50
      %s39 = sphi 0, %s46
      %s40 = sphi 0, %s38
      %s41 = sphi 0, %s39
      %s42 = sphi 0, %s40
      %s43 = sphi 0, %s41
      %s51 = sphi 0, %s51
      %s53 = sphi 0, %s51
      %s54 = sphi 0, %s53
      %s68 = sphi 0, %s54
      %s72 = sphi 0, %s72
      %s74 = sphi 0, %s72
      %s75 = sphi 0, %s74
      %s89 = sphi 0, %s75
      %s99 = sphi 0, %s101
      %s102 = sphi 0, %s99
      %s103 = sphi 0, %s102
      %s119 = sphi 0, %s103
      %s129 = sphi 0, %s131
      %s132 = sphi 0, %s129
      %s133 = sphi 0, %s132
      %s149 = sphi 0, %s133
      %s159 = sphi 0, %s161
      %s162 = sphi 0, %s159
      %s163 = sphi 0, %s162
      %s179 = sphi 0, %s163
      %s183 = sphi 0, %s183
      %s185 = sphi 0, %s183
      %s186 = sphi 0, %s185
      %s200 = sphi 0, %s186
      %s204 = sphi 0, %s204
      %s206 = sphi 0, %s204
      %s207 = sphi 0, %s206
      %s221 = sphi 0, %s207
      %s225 = sphi 0, %s225
      %s227 = sphi 0, %s225
      %s228 = sphi 0, %s227
      %s242 = sphi 0, %s228
      %s246 = sphi 0, %s246
      %s248 = sphi 0, %s246
      %s249 = sphi 0, %s248
      %s263 = sphi 0, %s249
      %s267 = sphi 0, %s267
      %s269 = sphi 0, %s267
      %s270 = sphi 0, %s269
      %s284 = sphi 0, %s270
      %s288 = sphi 0, %s288
      %s290 = sphi 0, %s288
      %s291 = sphi 0, %s290
      %s305 = sphi 0, %s291
      %s309 = sphi 0, %s309
      %s311 = sphi 0, %s309
      %s312 = sphi 0, %s311
      %s326 = sphi 0, %s312
      %s334 = sphi 0, %s336
      %s337 = sphi 0, %s334
      %s338 = sphi 0, %s337
      %s354 = sphi 0, %s338
    $region4: #{tpu_custom_call.1} parent=1 // loop_header_branch
      %34 = sbr.rel (%p32) target = $region8
    $region5: #{tpu_custom_call.1} parent=1 // loop_body
      %s36 = ssub.s32 %s31, 1
      %s37 = ssub.s32 %s31, 2
      %s44 = sadd.s32 1, %s39
      %p45 = scmp.ge.s32.totalorder %s44, 1
      %s46 = scalar_select %p45, 0, %s44
      %s47 = sadd.s32 1, %s38
      %s48 = scalar_select %p45, %s47, %s38
      %p49 = scmp.ge.s32.totalorder %s48, 2
      %s50 = scalar_select %p49, 0, %s48
      %s52 = sadd.s32 %s51, 1
      %p55 = scmp.eq.s32.totalorder %s31, 1
      %p56 = scmp.ne.s32.totalorder %s51, %s53
      %p57 = scmp.eq.s32.totalorder %s31, 0
      %p58 = por %p56, %p57
      %p59 = scmp.ne.s32.totalorder %s51, %s53
      %p60 = scmp.eq.s32.totalorder %s36, 1
      %p61 = por %p59, %p60
      %p62 = scmp.ne.s32.totalorder %s53, %s54
      %p63 = scmp.eq.s32.totalorder %s36, 0
      %p64 = por %p62, %p63
      %p65 = scmp.ne.s32.totalorder %s53, %s54
      %p66 = scmp.eq.s32.totalorder %s37, 1
      %p67 = por %p65, %p66
      %p69 = scmp.ne.s32.totalorder %s54, %s68
      %p70 = scmp.eq.s32.totalorder %s37, 0
      %p71 = por %p69, %p70
      %s73 = sadd.s32 %s72, 1
      %p76 = scmp.eq.s32.totalorder %s31, 1
      %p77 = scmp.ne.s32.totalorder %s72, %s74
      %p78 = scmp.eq.s32.totalorder %s31, 0
      %p79 = por %p77, %p78
      %p80 = scmp.ne.s32.totalorder %s72, %s74
      %p81 = scmp.eq.s32.totalorder %s36, 1
      %p82 = por %p80, %p81
      %p83 = scmp.ne.s32.totalorder %s74, %s75
      %p84 = scmp.eq.s32.totalorder %s36, 0
      %p85 = por %p83, %p84
      %p86 = scmp.ne.s32.totalorder %s74, %s75
      %p87 = scmp.eq.s32.totalorder %s37, 1
      %p88 = por %p86, %p87
      %p90 = scmp.ne.s32.totalorder %s75, %s89
      %p91 = scmp.eq.s32.totalorder %s37, 0
      %p92 = por %p90, %p91
      %s93 = ssub.s32 1, %s38
      %s94 = smul.u32 %s39, %s93
      %s95 = ssub.s32 1, %s50
      %s96 = smul.u32 %s46, %s95
      %s97 = ssub.s32 %s94, %s96
      %p98 = scmp.eq.s32.totalorder %s97, 0
      %s100 = sadd.s32 %s99, 1
      %s101 = scalar_select %p98, %s99, %s100
      %p104 = pneg %p98
      %p105 = scmp.eq.s32.totalorder %s31, 1
      %p106 = por %p104, %p105
      %p107 = scmp.ne.s32.totalorder %s99, %s102
      %p108 = scmp.eq.s32.totalorder %s31, 0
      %p109 = por %p107, %p108
      %p110 = scmp.ne.s32.totalorder %s99, %s102
      %p111 = scmp.eq.s32.totalorder %s36, 1
      %p112 = por %p110, %p111
      %p113 = scmp.ne.s32.totalorder %s102, %s103
      %p114 = scmp.eq.s32.totalorder %s36, 0
      %p115 = por %p113, %p114
      %p116 = scmp.ne.s32.totalorder %s102, %s103
      %p117 = scmp.eq.s32.totalorder %s37, 1
      %p118 = por %p116, %p117
      %p120 = scmp.ne.s32.totalorder %s103, %s119
      %p121 = scmp.eq.s32.totalorder %s37, 0
      %p122 = por %p120, %p121
      %s123 = ssub.s32 1, %s38
      %s124 = smul.u32 %s39, %s123
      %s125 = ssub.s32 1, %s50
      %s126 = smul.u32 %s46, %s125
      %s127 = ssub.s32 %s124, %s126
      %p128 = scmp.eq.s32.totalorder %s127, 0
      %s130 = sadd.s32 %s129, 1
      %s131 = scalar_select %p128, %s129, %s130
      %p134 = pneg %p128
      %p135 = scmp.eq.s32.totalorder %s31, 1
      %p136 = por %p134, %p135
      %p137 = scmp.ne.s32.totalorder %s129, %s132
      %p138 = scmp.eq.s32.totalorder %s31, 0
      %p139 = por %p137, %p138
      %p140 = scmp.ne.s32.totalorder %s129, %s132
      %p141 = scmp.eq.s32.totalorder %s36, 1
      %p142 = por %p140, %p141
      %p143 = scmp.ne.s32.totalorder %s132, %s133
      %p144 = scmp.eq.s32.totalorder %s36, 0
      %p145 = por %p143, %p144
      %p146 = scmp.ne.s32.totalorder %s132, %s133
      %p147 = scmp.eq.s32.totalorder %s37, 1
      %p148 = por %p146, %p147
      %p150 = scmp.ne.s32.totalorder %s133, %s149
      %p151 = scmp.eq.s32.totalorder %s37, 0
      %p152 = por %p150, %p151
      %s153 = ssub.s32 1, %s38
      %s154 = smul.u32 %s39, %s153
      %s155 = ssub.s32 1, %s50
      %s156 = smul.u32 %s46, %s155
      %s157 = ssub.s32 %s154, %s156
      %p158 = scmp.eq.s32.totalorder %s157, 0
      %s160 = sadd.s32 %s159, 1
      %s161 = scalar_select %p158, %s159, %s160
      %p164 = pneg %p158
      %p165 = scmp.eq.s32.totalorder %s31, 1
      %p166 = por %p164, %p165
      %p167 = scmp.ne.s32.totalorder %s159, %s162
      %p168 = scmp.eq.s32.totalorder %s31, 0
      %p169 = por %p167, %p168
      %p170 = scmp.ne.s32.totalorder %s159, %s162
      %p171 = scmp.eq.s32.totalorder %s36, 1
      %p172 = por %p170, %p171
      %p173 = scmp.ne.s32.totalorder %s162, %s163
      %p174 = scmp.eq.s32.totalorder %s36, 0
      %p175 = por %p173, %p174
      %p176 = scmp.ne.s32.totalorder %s162, %s163
      %p177 = scmp.eq.s32.totalorder %s37, 1
      %p178 = por %p176, %p177
      %p180 = scmp.ne.s32.totalorder %s163, %s179
      %p181 = scmp.eq.s32.totalorder %s37, 0
      %p182 = por %p180, %p181
      %s184 = sadd.s32 %s183, 1
      %p187 = scmp.eq.s32.totalorder %s31, 1
      %p188 = scmp.ne.s32.totalorder %s183, %s185
      %p189 = scmp.eq.s32.totalorder %s31, 0
      %p190 = por %p188, %p189
      %p191 = scmp.ne.s32.totalorder %s183, %s185
      %p192 = scmp.eq.s32.totalorder %s36, 1
      %p193 = por %p191, %p192
      %p194 = scmp.ne.s32.totalorder %s185, %s186
      %p195 = scmp.eq.s32.totalorder %s36, 0
      %p196 = por %p194, %p195
      %p197 = scmp.ne.s32.totalorder %s185, %s186
      %p198 = scmp.eq.s32.totalorder %s37, 1
      %p199 = por %p197, %p198
      %p201 = scmp.ne.s32.totalorder %s186, %s200
      %p202 = scmp.eq.s32.totalorder %s37, 0
      %p203 = por %p201, %p202
      %s205 = sadd.s32 %s204, 1
      %p208 = scmp.eq.s32.totalorder %s31, 1
      %p209 = scmp.ne.s32.totalorder %s204, %s206
      %p210 = scmp.eq.s32.totalorder %s31, 0
      %p211 = por %p209, %p210
      %p212 = scmp.ne.s32.totalorder %s204, %s206
      %p213 = scmp.eq.s32.totalorder %s36, 1
      %p214 = por %p212, %p213
      %p215 = scmp.ne.s32.totalorder %s206, %s207
      %p216 = scmp.eq.s32.totalorder %s36, 0
      %p217 = por %p215, %p216
      %p218 = scmp.ne.s32.totalorder %s206, %s207
      %p219 = scmp.eq.s32.totalorder %s37, 1
      %p220 = por %p218, %p219
      %p222 = scmp.ne.s32.totalorder %s207, %s221
      %p223 = scmp.eq.s32.totalorder %s37, 0
      %p224 = por %p222, %p223
      %s226 = sadd.s32 %s225, 1
      %p229 = scmp.eq.s32.totalorder %s31, 1
      %p230 = scmp.ne.s32.totalorder %s225, %s227
      %p231 = scmp.eq.s32.totalorder %s31, 0
      %p232 = por %p230, %p231
      %p233 = scmp.ne.s32.totalorder %s225, %s227
      %p234 = scmp.eq.s32.totalorder %s36, 1
      %p235 = por %p233, %p234
      %p236 = scmp.ne.s32.totalorder %s227, %s228
      %p237 = scmp.eq.s32.totalorder %s36, 0
      %p238 = por %p236, %p237
      %p239 = scmp.ne.s32.totalorder %s227, %s228
      %p240 = scmp.eq.s32.totalorder %s37, 1
      %p241 = por %p239, %p240
      %p243 = scmp.ne.s32.totalorder %s228, %s242
      %p244 = scmp.eq.s32.totalorder %s37, 0
      %p245 = por %p243, %p244
      %s247 = sadd.s32 %s246, 1
      %p250 = scmp.eq.s32.totalorder %s31, 1
      %p251 = scmp.ne.s32.totalorder %s246, %s248
      %p252 = scmp.eq.s32.totalorder %s31, 0
      %p253 = por %p251, %p252
      %p254 = scmp.ne.s32.totalorder %s246, %s248
      %p255 = scmp.eq.s32.totalorder %s36, 1
      %p256 = por %p254, %p255
      %p257 = scmp.ne.s32.totalorder %s248, %s249
      %p258 = scmp.eq.s32.totalorder %s36, 0
      %p259 = por %p257, %p258
      %p260 = scmp.ne.s32.totalorder %s248, %s249
      %p261 = scmp.eq.s32.totalorder %s37, 1
      %p262 = por %p260, %p261
      %p264 = scmp.ne.s32.totalorder %s249, %s263
      %p265 = scmp.eq.s32.totalorder %s37, 0
      %p266 = por %p264, %p265
      %s268 = sadd.s32 %s267, 1
      %p271 = scmp.eq.s32.totalorder %s31, 1
      %p272 = scmp.ne.s32.totalorder %s267, %s269
      %p273 = scmp.eq.s32.totalorder %s31, 0
      %p274 = por %p272, %p273
      %p275 = scmp.ne.s32.totalorder %s267, %s269
      %p276 = scmp.eq.s32.totalorder %s36, 1
      %p277 = por %p275, %p276
      %p278 = scmp.ne.s32.totalorder %s269, %s270
      %p279 = scmp.eq.s32.totalorder %s36, 0
      %p280 = por %p278, %p279
      %p281 = scmp.ne.s32.totalorder %s269, %s270
      %p282 = scmp.eq.s32.totalorder %s37, 1
      %p283 = por %p281, %p282
      %p285 = scmp.ne.s32.totalorder %s270, %s284
      %p286 = scmp.eq.s32.totalorder %s37, 0
      %p287 = por %p285, %p286
      %s289 = sadd.s32 %s288, 1
      %p292 = scmp.eq.s32.totalorder %s31, 1
      %p293 = scmp.ne.s32.totalorder %s288, %s290
      %p294 = scmp.eq.s32.totalorder %s31, 0
      %p295 = por %p293, %p294
      %p296 = scmp.ne.s32.totalorder %s288, %s290
      %p297 = scmp.eq.s32.totalorder %s36, 1
      %p298 = por %p296, %p297
      %p299 = scmp.ne.s32.totalorder %s290, %s291
      %p300 = scmp.eq.s32.totalorder %s36, 0
      %p301 = por %p299, %p300
      %p302 = scmp.ne.s32.totalorder %s290, %s291
      %p303 = scmp.eq.s32.totalorder %s37, 1
      %p304 = por %p302, %p303
      %p306 = scmp.ne.s32.totalorder %s291, %s305
      %p307 = scmp.eq.s32.totalorder %s37, 0
      %p308 = por %p306, %p307
      %s310 = sadd.s32 %s309, 1
      %p313 = scmp.eq.s32.totalorder %s31, 1
      %p314 = scmp.ne.s32.totalorder %s309, %s311
      %p315 = scmp.eq.s32.totalorder %s31, 0
      %p316 = por %p314, %p315
      %p317 = scmp.ne.s32.totalorder %s309, %s311
      %p318 = scmp.eq.s32.totalorder %s36, 1
      %p319 = por %p317, %p318
      %p320 = scmp.ne.s32.totalorder %s311, %s312
      %p321 = scmp.eq.s32.totalorder %s36, 0
      %p322 = por %p320, %p321
      %p323 = scmp.ne.s32.totalorder %s311, %s312
      %p324 = scmp.eq.s32.totalorder %s37, 1
      %p325 = por %p323, %p324
      %p327 = scmp.ne.s32.totalorder %s312, %s326
      %p328 = scmp.eq.s32.totalorder %s37, 0
      %p329 = por %p327, %p328
      %s330 = smul.u32 %s39, %s38
      %s331 = smul.u32 %s46, %s50
      %s332 = ssub.s32 %s330, %s331
      %p333 = scmp.eq.s32.totalorder %s332, 0
      %s335 = sadd.s32 %s334, 1
      %s336 = scalar_select %p333, %s334, %s335
      %p339 = pneg %p333
      %p340 = scmp.eq.s32.totalorder %s31, 1
      %p341 = por %p339, %p340
      %p342 = scmp.ne.s32.totalorder %s334, %s337
      %p343 = scmp.eq.s32.totalorder %s31, 0
      %p344 = por %p342, %p343
      %p345 = scmp.ne.s32.totalorder %s334, %s337
      %p346 = scmp.eq.s32.totalorder %s36, 1
      %p347 = por %p345, %p346
      %p348 = scmp.ne.s32.totalorder %s337, %s338
      %p349 = scmp.eq.s32.totalorder %s36, 0
      %p350 = por %p348, %p349
      %p351 = scmp.ne.s32.totalorder %s337, %s338
      %p352 = scmp.eq.s32.totalorder %s37, 1
      %p353 = por %p351, %p352
      %p355 = scmp.ne.s32.totalorder %s338, %s354
      %p356 = scmp.eq.s32.totalorder %s37, 0
      %p357 = por %p355, %p356
      %p358 = scmp.le.s32.totalorder 1, %s31
      %p359 = scmp.lt.s32.totalorder %s31, 3
      %p360 = pnand %p358, %p359
      %p361 = pneg %p360
      // Predicated region
      $region9: #{tpu_custom_call.1} parent=5 // pred_check
        _
      $region10: #{tpu_custom_call.1} parent=5 // pred_check_branch
        %363 = sbr.rel (%p360) target = $region12
      $region11: #{tpu_custom_call.1} parent=5 // pred_region
        %s364 = ssub.s32 %s31, 1
        // Predicated region
        $region13: #{tpu_custom_call.1} parent=11 // pred_check
          %p365 = pneg %p64
        $region14: #{tpu_custom_call.1} parent=11 // pred_check_branch
          %367 = sbr.rel (%p365) target = $region16
        $region15: #{tpu_custom_call.1} parent=11 // pred_region
          _
        $region16: #{tpu_custom_call.1} parent=11 // pred_fallthru
          _
        // Predicated region
        $region17: #{tpu_custom_call.1} parent=11 // pred_check
          %p368 = pneg %p85
        $region18: #{tpu_custom_call.1} parent=11 // pred_check_branch
          %370 = sbr.rel (%p368) target = $region20
        $region19: #{tpu_custom_call.1} parent=11 // pred_region
          _
        $region20: #{tpu_custom_call.1} parent=11 // pred_fallthru
          _
        // Predicated region
        $region21: #{tpu_custom_call.1} parent=11 // pred_check
          %p371 = pneg %p196
        $region22: #{tpu_custom_call.1} parent=11 // pred_check_branch
          %373 = sbr.rel (%p371) target = $region24
        $region23: #{tpu_custom_call.1} parent=11 // pred_region
          %s375 = ssub.s32 512, 512
          %376 = vsyncadd [#allocation14], %s375
          %s377 = sshll.u32 [#allocation13], 4
          %s378 = int_to_ptr.vmem [resolvable:$true] %s377
          %383 = dma.hbm_to_vmem [thread:$0]  %s5, 512, %s378, [#allocation14], 128, 128, 8
        $region24: #{tpu_custom_call.1} parent=11 // pred_fallthru
          _
        // Predicated region
        $region25: #{tpu_custom_call.1} parent=11 // pred_check
          %p384 = pneg %p217
        $region26: #{tpu_custom_call.1} parent=11 // pred_check_branch
          %386 = sbr.rel (%p384) target = $region28
        $region27: #{tpu_custom_call.1} parent=11 // pred_region
          %s388 = ssub.s32 512, 512
          %389 = vsyncadd [#allocation14], %s388
          %s390 = sshll.u32 [#allocation15], 4
          %s391 = int_to_ptr.vmem [resolvable:$true] %s390
          %396 = dma.hbm_to_vmem [thread:$0]  %s6, 512, %s391, [#allocation14], 128, 128, 8
        $region28: #{tpu_custom_call.1} parent=11 // pred_fallthru
          _
        // Predicated region
        $region29: #{tpu_custom_call.1} parent=11 // pred_check
          %p397 = pneg %p238
        $region30: #{tpu_custom_call.1} parent=11 // pred_check_branch
          %399 = sbr.rel (%p397) target = $region32
        $region31: #{tpu_custom_call.1} parent=11 // pred_region
          %s401 = ssub.s32 512, 512
          %402 = vsyncadd [#allocation17], %s401
          %s403 = sshll.u32 [#allocation16], 4
          %s404 = int_to_ptr.vmem [resolvable:$true] %s403
          %409 = dma.hbm_to_vmem [thread:$0]  %s7, 512, %s404, [#allocation17], 128, 128, 8
        $region32: #{tpu_custom_call.1} parent=11 // pred_fallthru
          _
        // Predicated region
        $region33: #{tpu_custom_call.1} parent=11 // pred_check
          %p410 = pneg %p259
        $region34: #{tpu_custom_call.1} parent=11 // pred_check_branch
          %412 = sbr.rel (%p410) target = $region36
        $region35: #{tpu_custom_call.1} parent=11 // pred_region
          _
        $region36: #{tpu_custom_call.1} parent=11 // pred_fallthru
          _
        // Predicated region
        $region37: #{tpu_custom_call.1} parent=11 // pred_check
          %p413 = pneg %p280
        $region38: #{tpu_custom_call.1} parent=11 // pred_check_branch
          %415 = sbr.rel (%p413) target = $region40
        $region39: #{tpu_custom_call.1} parent=11 // pred_region
          _
        $region40: #{tpu_custom_call.1} parent=11 // pred_fallthru
          _
        // Predicated region
        $region41: #{tpu_custom_call.1} parent=11 // pred_check
          %p416 = pneg %p301
        $region42: #{tpu_custom_call.1} parent=11 // pred_check_branch
          %418 = sbr.rel (%p416) target = $region44
        $region43: #{tpu_custom_call.1} parent=11 // pred_region
          _
        $region44: #{tpu_custom_call.1} parent=11 // pred_fallthru
          _
        // Predicated region
        $region45: #{tpu_custom_call.1} parent=11 // pred_check
          %p419 = pneg %p322
        $region46: #{tpu_custom_call.1} parent=11 // pred_check_branch
          %421 = sbr.rel (%p419) target = $region48
        $region47: #{tpu_custom_call.1} parent=11 // pred_region
          _
        $region48: #{tpu_custom_call.1} parent=11 // pred_fallthru
          _
      $region12: #{tpu_custom_call.1} parent=5 // pred_fallthru
        _
      %p422 = scmp.lt.s32.totalorder %s31, 2
      // Predicated region
      $region49: #{tpu_custom_call.1} parent=5 // pred_check
        %p423 = pneg %p422
      $region50: #{tpu_custom_call.1} parent=5 // pred_check_branch
        %425 = sbr.rel (%p423) target = $region52
      $region51: #{tpu_custom_call.1} parent=5 // pred_region
        // Predicated region
        $region53: #{tpu_custom_call.1} parent=51 // pred_check
          %p426 = pneg %p109
        $region54: #{tpu_custom_call.1} parent=51 // pred_check_branch
          %428 = sbr.rel (%p426) target = $region56
        $region55: #{tpu_custom_call.1} parent=51 // pred_region
          %s429 = sand.u32 %s99, 1
          %s430 = scalar_lea.sflag [#allocation8], %s429
          %s431 = sand.u32 %s99, 1
          %s432 = smul.addr %s431, 8
          %s433 = scalar_lea.vmem [#allocation7], %s432
          %s434 = ssub.s32 1, %s38
          %s435 = smul.u32 %s39, %s434
          %s437 = ssub.s32 128, 128
          %438 = vsyncadd %s430, %s437
          %s439 = smul.addr %s435, 128
          %s440 = scalar_lea.hbm %s2, %s439
          %s442 = sshll.u32 %s433, 4
          %s443 = int_to_ptr.vmem [resolvable:$true] %s442
          %445 = dma.hbm_to_vmem [thread:$0]  %s440, 128, %s443, %s430
        $region56: #{tpu_custom_call.1} parent=51 // pred_fallthru
          _
        // Predicated region
        $region57: #{tpu_custom_call.1} parent=51 // pred_check
          %p446 = pneg %p139
        $region58: #{tpu_custom_call.1} parent=51 // pred_check_branch
          %448 = sbr.rel (%p446) target = $region60
        $region59: #{tpu_custom_call.1} parent=51 // pred_region
          %s449 = sand.u32 %s31, 1
          %s450 = scalar_lea.sflag [#allocation11], %s449
          %s451 = sand.u32 %s129, 1
          %s452 = smul.addr %s451, 8
          %s453 = scalar_lea.vmem [#allocation10], %s452
          %s454 = ssub.s32 1, %s38
          %s455 = smul.u32 %s39, %s454
          %s457 = ssub.s32 128, 128
          %458 = vsyncadd %s450, %s457
          %s459 = smul.addr %s455, 128
          %s460 = scalar_lea.hbm %s3, %s459
          %s462 = sshll.u32 %s453, 4
          %s463 = int_to_ptr.vmem [resolvable:$true] %s462
          %465 = dma.hbm_to_vmem [thread:$0]  %s460, 128, %s463, %s450
        $region60: #{tpu_custom_call.1} parent=51 // pred_fallthru
          _
        // Predicated region
        $region61: #{tpu_custom_call.1} parent=51 // pred_check
          %p466 = pneg %p169
        $region62: #{tpu_custom_call.1} parent=51 // pred_check_branch
          %468 = sbr.rel (%p466) target = $region64
        $region63: #{tpu_custom_call.1} parent=51 // pred_region
          %s469 = sand.u32 %s31, 1
          %s470 = scalar_lea.sflag [#allocation11], %s469
          %s471 = sand.u32 %s159, 1
          %s472 = smul.addr %s471, 8
          %s473 = scalar_lea.vmem [#allocation12], %s472
          %s474 = ssub.s32 1, %s38
          %s475 = smul.u32 %s39, %s474
          %s477 = ssub.s32 128, 128
          %478 = vsyncadd %s470, %s477
          %s479 = smul.addr %s475, 128
          %s480 = scalar_lea.hbm %s4, %s479
          %s482 = sshll.u32 %s473, 4
          %s483 = int_to_ptr.vmem [resolvable:$true] %s482
          %485 = dma.hbm_to_vmem [thread:$0]  %s480, 128, %s483, %s470
        $region64: #{tpu_custom_call.1} parent=51 // pred_fallthru
          _
      $region52: #{tpu_custom_call.1} parent=5 // pred_fallthru
        _
      %p486 = scmp.le.s32.totalorder 1, %s31
      %p487 = scmp.lt.s32.totalorder %s31, 3
      %p488 = pnand %p486, %p487
      %p489 = pneg %p488
      // Predicated region
      $region65: #{tpu_custom_call.1} parent=5 // pred_check
        _
      $region66: #{tpu_custom_call.1} parent=5 // pred_check_branch
        %491 = sbr.rel (%p488) target = $region68
      $region67: #{tpu_custom_call.1} parent=5 // pred_region
        %s492 = ssub.s32 %s31, 1
        %s493 = sand.u32 %s102, 1
        %s494 = scalar_lea.sflag [#allocation8], %s493
        %s495 = sand.u32 %s102, 1
        %s496 = smul.addr %s495, 8
        %s497 = scalar_lea.vmem [#allocation7], %s496
        // Predicated region
        $region69: #{tpu_custom_call.1} parent=67 // pred_check
          %p498 = pneg %p115
        $region70: #{tpu_custom_call.1} parent=67 // pred_check_branch
          %500 = sbr.rel (%p498) target = $region72
        $region71: #{tpu_custom_call.1} parent=67 // pred_region
          %501 = dma.done %s494, 128
        $region72: #{tpu_custom_call.1} parent=67 // pred_fallthru
          _
        %s502 = sand.u32 %s36, 1
        %s503 = scalar_lea.sflag [#allocation11], %s502
        %s504 = sand.u32 %s132, 1
        %s505 = smul.addr %s504, 8
        %s506 = scalar_lea.vmem [#allocation10], %s505
        // Predicated region
        $region73: #{tpu_custom_call.1} parent=67 // pred_check
          %p507 = pneg %p145
        $region74: #{tpu_custom_call.1} parent=67 // pred_check_branch
          %509 = sbr.rel (%p507) target = $region76
        $region75: #{tpu_custom_call.1} parent=67 // pred_region
          %510 = dma.done %s503, 128
        $region76: #{tpu_custom_call.1} parent=67 // pred_fallthru
          _
        %s511 = sand.u32 %s36, 1
        %s512 = scalar_lea.sflag [#allocation11], %s511
        %s513 = sand.u32 %s162, 1
        %s514 = smul.addr %s513, 8
        %s515 = scalar_lea.vmem [#allocation12], %s514
        // Predicated region
        $region77: #{tpu_custom_call.1} parent=67 // pred_check
          %p516 = pneg %p175
        $region78: #{tpu_custom_call.1} parent=67 // pred_check_branch
          %518 = sbr.rel (%p516) target = $region80
        $region79: #{tpu_custom_call.1} parent=67 // pred_region
          %519 = dma.done %s512, 128
        $region80: #{tpu_custom_call.1} parent=67 // pred_fallthru
          _
        // Predicated region
        $region81: #{tpu_custom_call.1} parent=67 // pred_check
          %p520 = pneg %p196
        $region82: #{tpu_custom_call.1} parent=67 // pred_check_branch
          %522 = sbr.rel (%p520) target = $region84
        $region83: #{tpu_custom_call.1} parent=67 // pred_region
          %523 = dma.done [#allocation14], 512
        $region84: #{tpu_custom_call.1} parent=67 // pred_fallthru
          _
        // Predicated region
        $region85: #{tpu_custom_call.1} parent=67 // pred_check
          %p524 = pneg %p217
        $region86: #{tpu_custom_call.1} parent=67 // pred_check_branch
          %526 = sbr.rel (%p524) target = $region88
        $region87: #{tpu_custom_call.1} parent=67 // pred_region
          %527 = dma.done [#allocation14], 512
        $region88: #{tpu_custom_call.1} parent=67 // pred_fallthru
          _
        // Predicated region
        $region89: #{tpu_custom_call.1} parent=67 // pred_check
          %p528 = pneg %p238
        $region90: #{tpu_custom_call.1} parent=67 // pred_check_branch
          %530 = sbr.rel (%p528) target = $region92
        $region91: #{tpu_custom_call.1} parent=67 // pred_region
          %531 = dma.done [#allocation17], 512
        $region92: #{tpu_custom_call.1} parent=67 // pred_fallthru
          _
        %p532 = pneg %p64
        %p533 = pneg %p61
        %p534 = pneg %p85
        %p535 = pneg %p82
        %s536 = sand.u32 %s102, 1
        %s537 = scalar_lea.sflag [#allocation8], %s536
        %s538 = sand.u32 %s102, 1
        %s539 = smul.addr %s538, 8
        %s540 = scalar_lea.vmem [#allocation7], %s539
        %p541 = pneg %p115
        %p542 = pneg %p112
        %s543 = sand.u32 %s36, 1
        %s544 = scalar_lea.sflag [#allocation11], %s543
        %s545 = sand.u32 %s132, 1
        %s546 = smul.addr %s545, 8
        %s547 = scalar_lea.vmem [#allocation10], %s546
        %p548 = pneg %p145
        %p549 = pneg %p142
        %s550 = sand.u32 %s36, 1
        %s551 = scalar_lea.sflag [#allocation11], %s550
        %s552 = sand.u32 %s162, 1
        %s553 = smul.addr %s552, 8
        %s554 = scalar_lea.vmem [#allocation12], %s553
        %p555 = pneg %p175
        %p556 = pneg %p172
        %p557 = pneg %p196
        %p558 = pneg %p193
        %p559 = pneg %p217
        %p560 = pneg %p214
        %p561 = pneg %p238
        %p562 = pneg %p235
        %p563 = pneg %p259
        %p564 = pneg %p256
        %p565 = pneg %p280
        %p566 = pneg %p277
        %p567 = pneg %p301
        %p568 = pneg %p298
        %p569 = pneg %p322
        %p570 = pneg %p319
        %p571 = pneg %p350
        %p572 = pneg %p347
        %s573 = sand.u32 %s337, 1
        %s574 = scalar_lea.sflag [#allocation9], %s573
        %s575 = sand.u32 %s337, 1
        %s576 = scalar_lea.vmem [#allocation18], %s575
        %s577 = ssub.s32 1, %s40
        %s578 = smul.u32 %s41, %s577
        %s579 = ssub.s32 1, %s40
        %s580 = smul.u32 %s41, %s579
        %s581 = ssub.s32 1, %s40
        %s582 = smul.u32 %s41, %s581
        %s583 = smul.u32 %s41, %s40
        %s584 = sld [smem:[#allocation5]]
        %p585 = scmp.eq.s32.totalorder %s40, 0
        // Predicated region
        $region93: #{tpu_custom_call.1} parent=67 // pred_check
          %p586 = pneg %p585
        $region94: #{tpu_custom_call.1} parent=67 // pred_check_branch
          %588 = sbr.rel (%p586) target = $region96
        $region95: #{tpu_custom_call.1} parent=67 // pred_region
          %p589 = scmp.eq.s32.totalorder %s41, 0
          // Predicated region
          $region97: #{tpu_custom_call.1} parent=95 // pred_check
            %p590 = pneg %p589
          $region98: #{tpu_custom_call.1} parent=95 // pred_check_branch
            %592 = sbr.rel (%p590) target = $region100
          $region99: #{tpu_custom_call.1} parent=95 // pred_region
            %vm593 = vcmask 516096
            %594 = vst.msk [vmem:[#allocation2] sm:$0x1] %vm593, 0.0
            %595 = vst.msk [vmem:[#allocation3] sm:$0x1] %vm593, 0.0
          $region100: #{tpu_custom_call.1} parent=95 // pred_fallthru
            _
          %v596 = vld [vmem:[%s497] sm:$0xff]
          %v597 = vld [vmem:[#allocation13] sm:$0xff]
          %v598 = vld [vmem:[#allocation13 + $0x8] sm:$0xff]
          %v599 = vld [vmem:[#allocation13 + $0x10] sm:$0xff]
          %v600 = vld [vmem:[#allocation13 + $0x18] sm:$0xff]
          %v601 = vld [vmem:[%s506] sm:$0xff]
          %v602 = vld [vmem:[#allocation15] sm:$0xff]
          %v603 = vld [vmem:[#allocation15 + $0x8] sm:$0xff]
          %v604 = vld [vmem:[#allocation15 + $0x10] sm:$0xff]
          %v605 = vld [vmem:[#allocation15 + $0x18] sm:$0xff]
          %vm606 = vcmask 261120
          %v608 = vsel %vm606, %v601, 0
          %610 = vmatprep.subr.mxu0 0.0
          %611 = vmatpush1.msra.mxu0 0.0
          %612 = vmatprep.subr.mxu0 0.0
          %613 = vmatpush1.msra.mxu0 0.0
          %614 = vmatprep.subr.mxu0 0.0
          %615 = vmatpush1.msra.mxu0 0.0
          %616 = vmatprep.subr.mxu0 0.0
          %617 = vmatpush1.msra.mxu0 0.0
          %618 = vmatprep.subr.mxu0 0.0
          %619 = vmatpush1.msra.mxu0 0.0
          %620 = vmatprep.subr.mxu0 0.0
          %621 = vmatpush1.msra.mxu0 0.0
          %622 = vmatprep.subr.mxu0 0.0
          %623 = vmatpush1.msra.mxu0 0.0
          %624 = vmatprep.subr.mxu0 0.0
          %625 = vmatpush1.msra.mxu0 0.0
          %626 = vmatprep.subr.mxu0 0.0
          %627 = vmatpush1.msra.mxu0 0.0
          %628 = vmatprep.subr.mxu0 0.0
          %629 = vmatpush1.msra.mxu0 0.0
          %630 = vmatprep.subr.mxu0 0.0
          %631 = vmatpush1.msra.mxu0 0.0
          %632 = vmatprep.subr.mxu0 0.0
          %633 = vmatpush1.msra.mxu0 0.0
          %634 = vmatprep.subr.mxu0 0.0
          %635 = vmatpush1.msra.mxu0 %v605
          %636 = vmatprep.subr.mxu0 0.0
          %637 = vmatpush1.msra.mxu0 %v604
          %638 = vmatprep.subr.mxu0 0.0
          %639 = vmatpush1.msra.mxu0 %v603
          %640 = vmatprep.subr.mxu0 0.0
          %641 = vmatpush1.msra.mxu0 %v602
          %642 = vmatprep.subr.mxu0 0.0
          %643 = vmatpush2.msra.mxu0 0.0
          %644 = vmatprep.subr.mxu0 0.0
          %645 = vmatpush2.msra.mxu0 0.0
          %646 = vmatprep.subr.mxu0 0.0
          %647 = vmatpush2.msra.mxu0 0.0
          %648 = vmatprep.subr.mxu0 0.0
          %649 = vmatpush2.msra.mxu0 0.0
          %650 = vmatprep.subr.mxu0 0.0
          %651 = vmatpush2.msra.mxu0 0.0
          %652 = vmatprep.subr.mxu0 0.0
          %653 = vmatpush2.msra.mxu0 0.0
          %654 = vmatprep.subr.mxu0 0.0
          %655 = vmatpush2.msra.mxu0 0.0
          %656 = vmatprep.subr.mxu0 0.0
          %657 = vmatpush2.msra.mxu0 0.0
          %658 = vmatprep.subr.mxu0 0.0
          %659 = vmatpush2.msra.mxu0 0.0
          %660 = vmatprep.subr.mxu0 0.0
          %661 = vmatpush2.msra.mxu0 0.0
          %662 = vmatprep.subr.mxu0 0.0
          %663 = vmatpush2.msra.mxu0 0.0
          %664 = vmatprep.subr.mxu0 0.0
          %665 = vmatpush2.msra.mxu0 0.0
          %666 = vmatprep.subr.mxu0 0.0
          %667 = vmatpush2.msra.mxu0 0.0
          %668 = vmatprep.subr.mxu0 0.0
          %669 = vmatpush2.msra.mxu0 0.0
          %670 = vmatprep.subr.mxu0 0.0
          %671 = vmatpush2.msra.mxu0 0.0
          %672 = vmatprep.subr.mxu0 0.0
          %673 = vmatpush2.msra.mxu0 0.0
          %674 = vmatprep.mubr.f32.mxu0 0.0
          %675 = vmatmul.mubr.f32.gmra.mxu0 %v608
          %v676 = vpop.f32.mrf.mxu0
          %v677 = vadd.f32 0.0, %v676
          %v678 = vpop.f32.mrf.mxu0
          %679 = vdwg.mxu0
          %v681 = vsel %vm606, %v596, 0
          %683 = vmatprep.subr.mxu0 0.0
          %684 = vmatpush1.msra.mxu0 0.0
          %685 = vmatprep.subr.mxu0 0.0
          %686 = vmatpush1.msra.mxu0 0.0
          %687 = vmatprep.subr.mxu0 0.0
          %688 = vmatpush1.msra.mxu0 0.0
          %689 = vmatprep.subr.mxu0 0.0
          %690 = vmatpush1.msra.mxu0 0.0
          %691 = vmatprep.subr.mxu0 0.0
          %692 = vmatpush1.msra.mxu0 0.0
          %693 = vmatprep.subr.mxu0 0.0
          %694 = vmatpush1.msra.mxu0 0.0
          %695 = vmatprep.subr.mxu0 0.0
          %696 = vmatpush1.msra.mxu0 0.0
          %697 = vmatprep.subr.mxu0 0.0
          %698 = vmatpush1.msra.mxu0 0.0
          %699 = vmatprep.subr.mxu0 0.0
          %700 = vmatpush1.msra.mxu0 0.0
          %701 = vmatprep.subr.mxu0 0.0
          %702 = vmatpush1.msra.mxu0 0.0
          %703 = vmatprep.subr.mxu0 0.0
          %704 = vmatpush1.msra.mxu0 0.0
          %705 = vmatprep.subr.mxu0 0.0
          %706 = vmatpush1.msra.mxu0 0.0
          %707 = vmatprep.subr.mxu0 0.0
          %708 = vmatpush1.msra.mxu0 %v600
          %709 = vmatprep.subr.mxu0 0.0
          %710 = vmatpush1.msra.mxu0 %v599
          %711 = vmatprep.subr.mxu0 0.0
          %712 = vmatpush1.msra.mxu0 %v598
          %713 = vmatprep.subr.mxu0 0.0
          %714 = vmatpush1.msra.mxu0 %v597
          %715 = vmatprep.subr.mxu0 0.0
          %716 = vmatpush2.msra.mxu0 0.0
          %717 = vmatprep.subr.mxu0 0.0
          %718 = vmatpush2.msra.mxu0 0.0
          %719 = vmatprep.subr.mxu0 0.0
          %720 = vmatpush2.msra.mxu0 0.0
          %721 = vmatprep.subr.mxu0 0.0
          %722 = vmatpush2.msra.mxu0 0.0
          %723 = vmatprep.subr.mxu0 0.0
          %724 = vmatpush2.msra.mxu0 0.0
          %725 = vmatprep.subr.mxu0 0.0
          %726 = vmatpush2.msra.mxu0 0.0
          %727 = vmatprep.subr.mxu0 0.0
          %728 = vmatpush2.msra.mxu0 0.0
          %729 = vmatprep.subr.mxu0 0.0
          %730 = vmatpush2.msra.mxu0 0.0
          %731 = vmatprep.subr.mxu0 0.0
          %732 = vmatpush2.msra.mxu0 0.0
          %733 = vmatprep.subr.mxu0 0.0
          %734 = vmatpush2.msra.mxu0 0.0
          %735 = vmatprep.subr.mxu0 0.0
          %736 = vmatpush2.msra.mxu0 0.0
          %737 = vmatprep.subr.mxu0 0.0
          %738 = vmatpush2.msra.mxu0 0.0
          %739 = vmatprep.subr.mxu0 0.0
          %740 = vmatpush2.msra.mxu0 0.0
          %741 = vmatprep.subr.mxu0 0.0
          %742 = vmatpush2.msra.mxu0 0.0
          %743 = vmatprep.subr.mxu0 0.0
          %744 = vmatpush2.msra.mxu0 0.0
          %745 = vmatprep.subr.mxu0 0.0
          %746 = vmatpush2.msra.mxu0 0.0
          %747 = vmatprep.mubr.f32.mxu0 0.0
          %748 = vmatmul.mubr.f32.gmra.mxu0 %v681
          %v749 = vpop.f32.mrf.mxu0
          %v750 = vadd.f32 %v677, %v749
          %v751 = vpop.f32.mrf.mxu0
          %752 = vdwg.mxu0
          %v753 = vld [vmem:[%s515] sm:$0xff]
          %v754 = vld [vmem:[#allocation16] sm:$0xff]
          %v755 = vld [vmem:[#allocation16 + $0x8] sm:$0xff]
          %v756 = vld [vmem:[#allocation16 + $0x10] sm:$0xff]
          %v757 = vld [vmem:[#allocation16 + $0x18] sm:$0xff]
          %v759 = vsel %vm606, %v753, 0
          %761 = vmatprep.subr.mxu0 0.0
          %762 = vmatpush1.msra.mxu0 0.0
          %763 = vmatprep.subr.mxu0 0.0
          %764 = vmatpush1.msra.mxu0 0.0
          %765 = vmatprep.subr.mxu0 0.0
          %766 = vmatpush1.msra.mxu0 0.0
          %767 = vmatprep.subr.mxu0 0.0
          %768 = vmatpush1.msra.mxu0 0.0
          %769 = vmatprep.subr.mxu0 0.0
          %770 = vmatpush1.msra.mxu0 0.0
          %771 = vmatprep.subr.mxu0 0.0
          %772 = vmatpush1.msra.mxu0 0.0
          %773 = vmatprep.subr.mxu0 0.0
          %774 = vmatpush1.msra.mxu0 0.0
          %775 = vmatprep.subr.mxu0 0.0
          %776 = vmatpush1.msra.mxu0 0.0
          %777 = vmatprep.subr.mxu0 0.0
          %778 = vmatpush1.msra.mxu0 0.0
          %779 = vmatprep.subr.mxu0 0.0
          %780 = vmatpush1.msra.mxu0 0.0
          %781 = vmatprep.subr.mxu0 0.0
          %782 = vmatpush1.msra.mxu0 0.0
          %783 = vmatprep.subr.mxu0 0.0
          %784 = vmatpush1.msra.mxu0 0.0
          %785 = vmatprep.subr.mxu0 0.0
          %786 = vmatpush1.msra.mxu0 %v757
          %787 = vmatprep.subr.mxu0 0.0
          %788 = vmatpush1.msra.mxu0 %v756
          %789 = vmatprep.subr.mxu0 0.0
          %790 = vmatpush1.msra.mxu0 %v755
          %791 = vmatprep.subr.mxu0 0.0
          %792 = vmatpush1.msra.mxu0 %v754
          %793 = vmatprep.subr.mxu0 0.0
          %794 = vmatpush2.msra.mxu0 0.0
          %795 = vmatprep.subr.mxu0 0.0
          %796 = vmatpush2.msra.mxu0 0.0
          %797 = vmatprep.subr.mxu0 0.0
          %798 = vmatpush2.msra.mxu0 0.0
          %799 = vmatprep.subr.mxu0 0.0
          %800 = vmatpush2.msra.mxu0 0.0
          %801 = vmatprep.subr.mxu0 0.0
          %802 = vmatpush2.msra.mxu0 0.0
          %803 = vmatprep.subr.mxu0 0.0
          %804 = vmatpush2.msra.mxu0 0.0
          %805 = vmatprep.subr.mxu0 0.0
          %806 = vmatpush2.msra.mxu0 0.0
          %807 = vmatprep.subr.mxu0 0.0
          %808 = vmatpush2.msra.mxu0 0.0
          %809 = vmatprep.subr.mxu0 0.0
          %810 = vmatpush2.msra.mxu0 0.0
          %811 = vmatprep.subr.mxu0 0.0
          %812 = vmatpush2.msra.mxu0 0.0
          %813 = vmatprep.subr.mxu0 0.0
          %814 = vmatpush2.msra.mxu0 0.0
          %815 = vmatprep.subr.mxu0 0.0
          %816 = vmatpush2.msra.mxu0 0.0
          %817 = vmatprep.subr.mxu0 0.0
          %818 = vmatpush2.msra.mxu0 0.0
          %819 = vmatprep.subr.mxu0 0.0
          %820 = vmatpush2.msra.mxu0 0.0
          %821 = vmatprep.subr.mxu0 0.0
          %822 = vmatpush2.msra.mxu0 0.0
          %823 = vmatprep.subr.mxu0 0.0
          %824 = vmatpush2.msra.mxu0 0.0
          %825 = vmatprep.mubr.f32.mxu0 0.0
          %826 = vmatmul.mubr.f32.gmra.mxu0 %v759
          %v827 = vpop.f32.mrf.mxu0
          %v828 = vadd.f32 0.0, %v827
          %v829 = vpop.f32.mrf.mxu0
          %830 = vdwg.mxu0
          %v831 = vadd.f32 %v750, %v828
          %v832 = vld [vmem:[%s8] sm:$0x1]
          %v834 = vlaneseq
          %v835 = vshrl.u32 %v834, 7
          %v836 = vsub.s32 0, %v835
          %v837 = vrot.slane %v832, %v836
          %v839 = vadd.f32 %v831, %v837
          %s840 = smul.u32 %s41, 8
          %s841 = scalar_lea.vmem [#allocation4], %s840
          %vm842 = vcmask 523264
          %843 = vst.msk [vmem:[%s841] sm:$0xff] %vm842, %v839
          %v844 = vlaneseq
          %v845 = vshrl.u32 %v844, 7
          %v846 = vstv %s840
          %v847 = vadd.s32 %v845, %v846
          %v848 = vstv %s584
          %vm849 = vcmp.lt.s32.totalorder %v847, %v848
          %v850 = vsel %vm849, 1, 0
          %vm851 = vcmp.eq.s32.totalorder %v850, 1
          %v852 = vsel %vm851, %v839, 0.0
          %v853 = vld [vmem:[#allocation2] sm:$0x1]
          %v854 = vsel %vm842, %v852, 0.0
          %v855 = vrot.slane %v854, 4
          %v856 = vadd.f32 %v854, %v855
          %v857 = vrot.slane %v856, 2
          %v858 = vadd.f32 %v856, %v857
          %v859 = vrot.slane %v858, 1
          %v860 = vadd.f32 %v858, %v859
          %v861 = vadd.f32 %v853, %v860
          %vm862 = vcmask 516096
          %863 = vst.msk [vmem:[#allocation2] sm:$0x1] %vm862, %v861
          %v864 = vld [vmem:[#allocation3] sm:$0x1]
          %v865 = vmul.f32 %v852, %v852
          %v866 = vsel %vm842, %v865, 0.0
          %v867 = vrot.slane %v866, 4
          %v868 = vadd.f32 %v866, %v867
          %v869 = vrot.slane %v868, 2
          %v870 = vadd.f32 %v868, %v869
          %v871 = vrot.slane %v870, 1
          %v872 = vadd.f32 %v870, %v871
          %v873 = vadd.f32 %v864, %v872
          %874 = vst.msk [vmem:[#allocation3] sm:$0x1] %vm862, %v873
          // Predicated region
          $region101: #{tpu_custom_call.1} parent=95 // pred_check
            %p875 = pneg %p589
          $region102: #{tpu_custom_call.1} parent=95 // pred_check_branch
            %877 = sbr.rel (%p875) target = $region104
          $region103: #{tpu_custom_call.1} parent=95 // pred_region
            %s878 = scvt.s32.f32 %s584
            %v879 = vstv %s878
            %v880 = vrcp.pop %v879
            %s881 = vtos %v880
            %v882 = vld [vmem:[#allocation2] sm:$0x1]
            %v883 = vstv %s881
            %v884 = vmul.f32 %v882, %v883
            %v885 = vld [vmem:[#allocation3] sm:$0x1]
            %v886 = vmul.f32 %v885, %v883
            %v887 = vmul.f32 %v884, %v884
            %v888 = vsub.f32 %v886, %v887
            %v889 = vadd.f32 %v888, 1e-05
            %v890 = vrsqrt.pop %v889
            %v891 = vld [vmem:[%s9] sm:$0x1]
            %v892 = vmul.f32 %v891, %v890
            %893 = vst.msk [vmem:[#allocation2] sm:$0x1] %vm862, %v892
            %v894 = vld [vmem:[%s10] sm:$0x1]
            %v895 = vmul.f32 %v884, %v892
            %v896 = vsub.f32 %v894, %v895
            %897 = vst.msk [vmem:[#allocation3] sm:$0x1] %vm862, %v896
          $region104: #{tpu_custom_call.1} parent=95 // pred_fallthru
            _
        $region96: #{tpu_custom_call.1} parent=67 // pred_fallthru
          _
        %p898 = scmp.eq.s32.totalorder %s40, 1
        // Predicated region
        $region105: #{tpu_custom_call.1} parent=67 // pred_check
          %p899 = pneg %p898
        $region106: #{tpu_custom_call.1} parent=67 // pred_check_branch
          %901 = sbr.rel (%p899) target = $region108
        $region107: #{tpu_custom_call.1} parent=67 // pred_region
          %s902 = smul.u32 %s41, 8
          %s903 = scalar_lea.vmem [#allocation4], %s902
          %v904 = vld [vmem:[%s903] sm:$0xff]
          %v905 = vld [vmem:[#allocation2] sm:$0x1]
          %v907 = vlaneseq
          %v908 = vshrl.u32 %v907, 7
          %v909 = vsub.s32 0, %v908
          %v910 = vrot.slane %v905, %v909
          %v912 = vmul.f32 %v904, %v910
          %v913 = vld [vmem:[#allocation3] sm:$0x1]
          %v915 = vlaneseq
          %v916 = vshrl.u32 %v915, 7
          %v917 = vsub.s32 0, %v916
          %v918 = vrot.slane %v913, %v917
          %v920 = vadd.f32 %v912, %v918
          %v921 = vmax.f32 %v920, 0.0
          %v922 = vld [vmem:[%s11] sm:$0x1]
          %v924 = vlaneseq
          %v925 = vshrl.u32 %v924, 7
          %v926 = vsub.s32 0, %v925
          %v927 = vrot.slane %v922, %v926
          %v929 = vmul.f32 %v921, %v927
          %vm930 = vcmask 523264
          %v931 = vsel %vm930, %v929, 0.0
          %932 = vadd.xlane.f32.xlu0 %v931
          %v933 = vpop.xlane.xlu0 %932
          %s934 = sld [smem:[#allocation6]]
          %v935 = vstv %s934
          %v936 = vadd.f32 %v933, %v935
          %v937 = vxor.u32 %v936, 2147483648
          %v938 = vmul.f32 %v937, 1.442695
          %v939 = vpow.pop %v938
          %v940 = vadd.f32 %v939, 1.0
          %v941 = vrcp.pop %v940
          %v942 = vmul.f32 1.0, %v941
          %v944 = vlaneseq
          %v945 = vand.u32 %v944, 127
          %v946 = vlaneseq
          %v947 = vshrl.u32 %v946, 7
          %v948 = vsub.s32 %v945, %v947
          %v949 = vrot.slane %v942, %v948
          %vm951 = vcmask 57344
          %952 = vst.msk [vmem:[%s576] sm:$0x1] %vm951, %v949
        $region108: #{tpu_custom_call.1} parent=67 // pred_fallthru
          _
        %s953 = sand.u32 %s337, 1
        %s954 = scalar_lea.sflag [#allocation9], %s953
        %s955 = sand.u32 %s337, 1
        %s956 = scalar_lea.vmem [#allocation18], %s955
        // Predicated region
        $region109: #{tpu_custom_call.1} parent=67 // pred_check
          %p957 = pneg %p347
        $region110: #{tpu_custom_call.1} parent=67 // pred_check_branch
          %959 = sbr.rel (%p957) target = $region112
        $region111: #{tpu_custom_call.1} parent=67 // pred_region
          %s960 = smul.u32 %s41, %s40
          %s962 = ssub.s32 16, 16
          %963 = vsyncadd %s954, %s962
          %s964 = smul.addr %s960, 16
          %s965 = scalar_lea.hbm %s12, %s964
          %s967 = sshll.u32 %s956, 4
          %s968 = int_to_ptr.vmem [resolvable:$true] %s967
          %970 = dma.vmem_to_hbm [thread:$0]  %s968, 16, %s965, %s954
        $region112: #{tpu_custom_call.1} parent=67 // pred_fallthru
          _
      $region68: #{tpu_custom_call.1} parent=5 // pred_fallthru
        _
      %p971 = scmp.le.s32.totalorder 2, %s31
      // Predicated region
      $region113: #{tpu_custom_call.1} parent=5 // pred_check
        %p972 = pneg %p971
      $region114: #{tpu_custom_call.1} parent=5 // pred_check_branch
        %974 = sbr.rel (%p972) target = $region116
      $region115: #{tpu_custom_call.1} parent=5 // pred_region
        %s975 = ssub.s32 %s31, 2
        // Predicated region
        $region117: #{tpu_custom_call.1} parent=115 // pred_check
          %p976 = pneg %p353
        $region118: #{tpu_custom_call.1} parent=115 // pred_check_branch
          %978 = sbr.rel (%p976) target = $region120
        $region119: #{tpu_custom_call.1} parent=115 // pred_region
          %s979 = sand.u32 %s338, 1
          %s980 = scalar_lea.sflag [#allocation9], %s979
          %s981 = sand.u32 %s338, 1
          %s982 = scalar_lea.vmem [#allocation18], %s981
          %983 = dma.done %s980, 16
        $region120: #{tpu_custom_call.1} parent=115 // pred_fallthru
          _
      $region116: #{tpu_custom_call.1} parent=5 // pred_fallthru
        _
    $region6: #{tpu_custom_call.1} parent=1 // loop_footer
      %s35 = sadd.s32 1, %s31
    $region7: #{tpu_custom_call.1} parent=1 // loop_footer_branch
      %30 = sbr.rel target = $region3
    $region8: #{tpu_custom_call.1} parent=1 // loop_exit
      _
    %984 = vsyncpa [#allocation8], 1
    %s985 = scalar_lea.sflag [#allocation8], 1
    %986 = vsyncpa %s985, 1
    %987 = vsyncpa [#allocation11], 1
    %s988 = scalar_lea.sflag [#allocation11], 1
    %989 = vsyncpa %s988, 1
    %990 = vsyncpa [#allocation14], 1
    %991 = vsyncpa [#allocation17], 1
    %992 = vsyncpa [#allocation9], 1
    %s993 = scalar_lea.sflag [#allocation9], 1
    %994 = vsyncpa %s993, 1

</llo_original>
